<compile_context>
chip_gen: v6e
topology: v6e:2x2x1
jax: 0.10.0
libtpu: 0.0.40
codegen_flags: <defaults>
</compile_context>

<pallas_src>
import math

import jax
import jax.numpy as jnp
from jax.experimental import pallas as pl
from jax.experimental.pallas import tpu as pltpu

_NEG_FILL = float(-(2 ** 32) + 1)   # torch masked_fill value


def _make_mha_kernel(D, Tk, Tk_pad, block_b, has_mask, has_qmask):
    inv_sqrt_d = float(1.0 / math.sqrt(D))   # plain Python float -> not a captured const

    def kernel(*refs):
        i = 0
        k_ref = refs[i]; i += 1
        v_ref = refs[i]; i += 1
        q_ref = refs[i]; i += 1
        mask_ref = None
        qmask_ref = None
        if has_mask:
            mask_ref = refs[i]; i += 1
        if has_qmask:
            qmask_ref = refs[i]; i += 1
        out_ref = refs[i]
        attn_ref = refs[i + 1]

        # Fold 1/sqrt(d) into q (scales bb*Tq*D elems, not bb*Tq*Tk); feed the
        # MXU bf16 with f32 accumulation.  bf16 inputs pass straight through.
        q = (q_ref[...] * inv_sqrt_d).astype(jnp.bfloat16)       # (bb, Tq, D)
        k = k_ref[...].astype(jnp.bfloat16)                      # (bb, Tk_pad, D)
        v = v_ref[...].astype(jnp.bfloat16)                      # (bb, Tk_pad, D)

        # scores = q @ k^T: contract last dims directly (no explicit transpose).
        scores = jnp.einsum("bqd,bkd->bqk", q, k,
                            preferred_element_type=jnp.float32)  # (bb, Tq, Tk_pad) f32

        if Tk_pad > Tk:
            # Mask the zero-padded key columns so softmax ignores them.
            col = jax.lax.broadcasted_iota(jnp.int32, (1, 1, Tk_pad), 2)
            scores = jnp.where(col >= Tk, _NEG_FILL, scores)
        if has_mask:
            # masked_fill(mask, -2**32 + 1); mask ships as bf16 {0, 1}.
            scores = jnp.where(mask_ref[...] != 0, _NEG_FILL, scores)

        # Numerically stable softmax in f32.  Exact normalization so the
        # exported attention rows sum to 1 (per correctness review).
        m = jnp.max(scores, axis=-1, keepdims=True)
        e = jnp.exp(scores - m)
        attn = e / jnp.sum(e, axis=-1, keepdims=True)

        if has_qmask:
            # Compact (bb, Tq, 1) mask broadcast on the VPU.
            attn = attn * qmask_ref[...].astype(jnp.float32)

        # TODO(synk): training-mode nn.Dropout(hp.self_att_dropout_rate) on the
        # stored attention is not applied (eval-mode identity only).
        attn_ref[...] = attn.astype(attn_ref.dtype)              # lane-dense (Tk_pad % 128 == 0)

        # result = attn @ value (bf16 operands, f32 accumulation), written as a
        # lane-dense head-concatenated slab (Tq, block_b * D).
        res = jnp.einsum("bqk,bkd->bqd", attn.astype(jnp.bfloat16), v,
                         preferred_element_type=jnp.float32)     # (bb, Tq, D)
        for h in range(block_b):
            out_ref[0, :, h * D:(h + 1) * D] = res[h].astype(out_ref.dtype)

    return kernel


def _vmem_budget_bytes():
    """Generation-aware VMEM budget (v7x: 64 MiB physical, v5e/v6e: 128 MiB)."""
    try:
        cap = int(pltpu.get_tpu_info().vmem_capacity_bytes)
    except Exception:
        cap = 64 << 20   # unknown -> assume the smallest generation (v7x)
    budget = cap // 3          # ~21 MiB on v7x, ~42 MiB on v5e/v6e (double-buffered set)
    limit = (cap * 3) // 4     # explicitly raised scoped limit, with headroom
    return budget, limit


def _choose_block_b(B, Tq, Tk_pad, D, in_itemsize, out_itemsize, attn_itemsize,
                    has_mask, has_qmask, budget_bytes):
    """Largest divisor of B (capped at B//2 so v7x's two TensorCores both get a
    'parallel' grid step) whose double-buffered block footprint fits the budget."""
    def footprint(bb):
        kv_in = 2 * bb * Tk_pad * D * in_itemsize           # key + value blocks
        q_in = bb * Tq * D * in_itemsize
        m_in = bb * Tq * Tk_pad * 2 if has_mask else 0      # bf16 mask
        qm_in = bb * Tq * 2 if has_qmask else 0              # compact bf16 qmask
        res_o = bb * Tq * D * out_itemsize
        att_o = bb * Tq * Tk_pad * attn_itemsize
        streams = 2 * (kv_in + q_in + m_in + qm_in + res_o + att_o)   # double-buffered
        interm = 3 * bb * Tq * Tk_pad * 4 + 2 * bb * Tq * D * 4       # f32 scores/attn/result temps
        return streams + interm

    bb = max(1, B // 2)
    while bb > 1 and (B % bb or footprint(bb) > budget_bytes):
        bb -= 1
    return max(bb, 1)


def multihead_attention(key, value, query, mask=None, query_mask=None,
                        block_b=None, out_dtype=jnp.float32,
                        attn_dtype=jnp.bfloat16):
    """Pallas port of MultiheadAttention.forward.

    key, value : (B, Tk, D) float32 or bfloat16
    query      : (B, Tq, D) float32 or bfloat16
    mask       : optional (B, Tq, Tk) / (B, 1, Tk) / (B, Tk); nonzero -> masked_fill(-2**32+1)
    query_mask : optional (B, Tq) / (B, Tq, 1) (compact) or (B, Tq, Tk); multiplied into attn
    Returns (result (B, Tq, D), attention (B//4, 4, Tq, Tk)).
    """
    B, Tk, D = key.shape
    Tq = query.shape[1]
    assert value.shape == (B, Tk, D) and query.shape == (B, Tq, D)
    assert B % 4 == 0, "attention .view(B//4, 4, ...) requires B % 4 == 0"

    has_mask = mask is not None
    has_qmask = query_mask is not None

    # Lane-dense attention stream: round Tk up to a multiple of 128 (a no-op for
    # production Tk); the padded key columns are masked inside the kernel.
    Tk_pad = max(128, ((Tk + 127) // 128) * 128)
    if Tk_pad > Tk:
        pad = ((0, 0), (0, Tk_pad - Tk), (0, 0))
        key = jnp.pad(key, pad)
        value = jnp.pad(value, pad)

    budget, vmem_limit = _vmem_budget_bytes()
    if block_b is None:
        block_b = _choose_block_b(
            B, Tq, Tk_pad, D, key.dtype.itemsize,
            jnp.dtype(out_dtype).itemsize, jnp.dtype(attn_dtype).itemsize,
            has_mask, has_qmask, budget)
    assert B % block_b == 0
    nblk = B // block_b

    inputs = [key, value, query]
    in_specs = [
        pl.BlockSpec((block_b, Tk_pad, D), lambda b: (b, 0, 0)),   # key
        pl.BlockSpec((block_b, Tk_pad, D), lambda b: (b, 0, 0)),   # value
        pl.BlockSpec((block_b, Tq, D), lambda b: (b, 0, 0)),       # query
    ]
    if has_mask:
        m = mask
        if m.ndim == 2:                      # (B, Tk) key-padding mask
            m = m[:, None, :]
        assert m.shape[0] == B and m.shape[1] in (1, Tq) and m.shape[2] == Tk
        m = m.astype(jnp.bfloat16)
        if Tk_pad > Tk:
            m = jnp.pad(m, ((0, 0), (0, 0), (0, Tk_pad - Tk)))
        inputs.append(m)
        in_specs.append(pl.BlockSpec((block_b, m.shape[1], Tk_pad),
                                     lambda b: (b, 0, 0)))
    if has_qmask:
        qm = query_mask
        if qm.ndim == 2:
            qm = qm[:, :, None]
        assert qm.shape[0] == B and qm.shape[1] in (1, Tq) and qm.shape[2] in (1, Tk)
        qm = qm.astype(jnp.bfloat16)
        if qm.shape[2] == Tk and Tk_pad > Tk:
            qm = jnp.pad(qm, ((0, 0), (0, 0), (0, Tk_pad - Tk)))
        inputs.append(qm)
        in_specs.append(pl.BlockSpec((block_b, qm.shape[1], qm.shape[2]),
                                     lambda b: (b, 0, 0)))

    kernel = _make_mha_kernel(D, Tk, Tk_pad, block_b, has_mask, has_qmask)

    out_slab, attn = pl.pallas_call(
        kernel,
        out_shape=(
            jax.ShapeDtypeStruct((nblk, Tq, block_b * D), out_dtype),   # head-concat slab
            jax.ShapeDtypeStruct((B, Tq, Tk_pad), attn_dtype),          # bf16 attention
        ),
        grid_spec=pltpu.PrefetchScalarGridSpec(
            num_scalar_prefetch=0,
            grid=(nblk,),
            in_specs=in_specs,
            out_specs=[
                pl.BlockSpec((1, Tq, block_b * D), lambda b: (b, 0, 0)),
                pl.BlockSpec((block_b, Tq, Tk_pad), lambda b: (b, 0, 0)),
            ],
        ),
        compiler_params=pltpu.CompilerParams(
            dimension_semantics=("parallel",),   # batch/head axis shards across v7x TCs
            vmem_limit_bytes=vmem_limit,
        ),
    )(*inputs)

    # Undo the head-concat slab layout (cheap plumbing on the smallest stream)
    # and drop the padded key columns from the attention.
    result = (out_slab.reshape(nblk, Tq, block_b, D)
              .transpose(0, 2, 1, 3).reshape(B, Tq, D))
    attention = attn[:, :, :Tk].reshape(B // 4, 4, Tq, Tk)
    return result, attention


def _reference(key, value, query, mask=None, query_mask=None):
    """Pure f32 reference matching the PyTorch module semantics (eval mode)."""
    kf, vf, qf = (a.astype(jnp.float32) for a in (key, value, query))
    d = key.shape[-1]
    scores = jnp.einsum("bqd,bkd->bqk", qf, kf) / math.sqrt(d)
    if mask is not None:
        scores = jnp.where(mask, _NEG_FILL, scores)
    attn = jax.nn.softmax(scores, axis=-1)
    if query_mask is not None:
        qm = query_mask if query_mask.ndim == 3 else query_mask[:, :, None]
        attn = attn * qm.astype(jnp.float32)
    out = jnp.einsum("bqk,bkd->bqd", attn, vf)
    B, Tk = key.shape[0], key.shape[1]
    return out, attn.reshape(B // 4, 4, query.shape[1], Tk)


if __name__ == "__main__":
    # B = 8 (= batch 2 * num_attn_heads 4), Tq = Tk = 16, d_head = 32.
    B, T, D = 8, 16, 32
    rng = jax.random.PRNGKey(0)
    kq, kk, kv, km, kqm = jax.random.split(rng, 5)
    # bf16 q/k/v as the upstream projection layers would emit: halves input DMA.
    query = jax.random.normal(kq, (B, T, D), jnp.float32).astype(jnp.bfloat16)
    key = jax.random.normal(kk, (B, T, D), jnp.float32).astype(jnp.bfloat16)
    value = jax.random.normal(kv, (B, T, D), jnp.float32).astype(jnp.bfloat16)

    # Eval-mode BERTEncoder path: mask=None, query_mask=None.
    result, attention = multihead_attention(key, value, query)
    result = jax.block_until_ready(result)
    attention = jax.block_until_ready(attention)
    assert result.shape == (B, T, D) and result.dtype == jnp.float32
    assert attention.shape == (B // 4, 4, T, T)

    ref_out, ref_attn = _reference(key, value, query)
    assert jnp.allclose(result, ref_out, atol=4e-2, rtol=4e-2)
    assert jnp.allclose(attention.astype(jnp.float32), ref_attn, atol=4e-2, rtol=4e-2)

    # Masked path (training-style): boolean attention mask + compact query mask.
    mask = jax.random.uniform(km, (B, T, T)) < 0.2
    qmask = (jax.random.uniform(kqm, (B, T)) < 0.9).astype(jnp.float32)
    result_m, attention_m = multihead_attention(key, value, query,
                                                mask=mask, query_mask=qmask)
    result_m = jax.block_until_ready(result_m)
    attention_m = jax.block_until_ready(attention_m)
    ref_out_m, ref_attn_m = _reference(key, value, query,
                                       mask=mask, query_mask=qmask)
    assert jnp.allclose(result_m, ref_out_m, atol=4e-2, rtol=4e-2)
    assert jnp.allclose(attention_m.astype(jnp.float32), ref_attn_m,
                        atol=4e-2, rtol=4e-2)

    print("KERNEL_OK")
</pallas_src>

<mosaic_0001>
module attributes {stable_mosaic.version = 11 : i64} {
  func.func @kernel(%arg0: i32, %arg1: memref<4x128x32xbf16, #tpu.memory_space<vmem>>, %arg2: memref<4x128x32xbf16, #tpu.memory_space<vmem>>, %arg3: memref<4x16x32xbf16, #tpu.memory_space<vmem>>, %arg4: memref<1x16x128xf32, #tpu.memory_space<vmem>>, %arg5: memref<4x16x128xbf16, #tpu.memory_space<vmem>>) attributes {dimension_semantics = [#tpu.dimension_semantics<parallel>], iteration_bounds = array<i64: 2>, scalar_prefetch = 0 : i64, scratch_operands = 0 : i64, tpu.core_type = #tpu.core_type<tc>, window_params = [{transform_indices = @transform_0, window_bounds = array<i64: 4, 128, 32>}, {transform_indices = @transform_1, window_bounds = array<i64: 4, 128, 32>}, {transform_indices = @transform_2, window_bounds = array<i64: 4, 16, 32>}, {transform_indices = @transform_3, window_bounds = array<i64: 1, 16, 128>}, {transform_indices = @transform_4, window_bounds = array<i64: 4, 16, 128>}]} {
    %c0 = arith.constant 0 : index
    %c0_0 = arith.constant 0 : index
    %c0_1 = arith.constant 0 : index
    %0 = vector.load %arg3[%c0, %c0_0, %c0_1] : memref<4x16x32xbf16, #tpu.memory_space<vmem>>, vector<4x16x32xbf16>
    %cst = arith.constant 1.767580e-01 : bf16
    %1 = vector.broadcast %cst : bf16 to vector<4x16x32xbf16>
    %2 = arith.mulf %0, %1 : vector<4x16x32xbf16>
    %c0_2 = arith.constant 0 : index
    %c0_3 = arith.constant 0 : index
    %c0_4 = arith.constant 0 : index
    %3 = vector.load %arg1[%c0_2, %c0_3, %c0_4] : memref<4x128x32xbf16, #tpu.memory_space<vmem>>, vector<4x128x32xbf16>
    %c0_5 = arith.constant 0 : index
    %c0_6 = arith.constant 0 : index
    %c0_7 = arith.constant 0 : index
    %4 = vector.load %arg2[%c0_5, %c0_6, %c0_7] : memref<4x128x32xbf16, #tpu.memory_space<vmem>>, vector<4x128x32xbf16>
    "tpu.trace_start"() <{level = 10 : i32, message = "bqd,bkd->bqk"}> : () -> ()
    %cst_8 = arith.constant dense<0.000000e+00> : vector<4x16x128xf32>
    %5 = tpu.matmul %2, %3, %cst_8 {dimension_numbers = #tpu.dot_dimension_numbers<[2], [2], [1], [1], [0, 0, 0, 1, 1, 1], [0], [0]>} : vector<4x16x32xbf16>, vector<4x128x32xbf16>, vector<4x16x128xf32> -> vector<4x16x128xf32>
    "tpu.trace_stop"() : () -> ()
    %6 = tpu.iota {dimensions = array<i32: 2>} : vector<1x1x128xi32>
    %c16_i32 = arith.constant 16 : i32
    %7 = vector.broadcast %c16_i32 : i32 to vector<1x1x128xi32>
    %8 = arith.cmpi sge, %6, %7 : vector<1x1x128xi32>
    %cst_9 = arith.constant -4.2949673E+9 : f32
    %9 = vector.shape_cast %8 : vector<1x1x128xi1> to vector<1x1x128xi1>
    %10 = vector.broadcast %9 : vector<1x1x128xi1> to vector<4x16x128xi1>
    %11 = vector.broadcast %cst_9 : f32 to vector<4x16x128xf32>
    %12 = arith.select %10, %11, %5 : vector<4x16x128xi1>, vector<4x16x128xf32>
    %cst_10 = arith.constant dense<0xFF800000> : vector<4x16xf32>
    %13 = vector.multi_reduction <maximumf>, %12, %cst_10 [2] : vector<4x16x128xf32> to vector<4x16xf32>
    %14 = vector.shape_cast %13 : vector<4x16xf32> to vector<4x16x1xf32>
    %15 = vector.broadcast %14 : vector<4x16x1xf32> to vector<4x16x128xf32>
    %16 = arith.subf %12, %15 : vector<4x16x128xf32>
    %17 = math.exp %16 : vector<4x16x128xf32>
    %cst_11 = arith.constant dense<0.000000e+00> : vector<4x16xf32>
    %18 = vector.multi_reduction <add>, %17, %cst_11 [2] : vector<4x16x128xf32> to vector<4x16xf32>
    %19 = vector.shape_cast %18 : vector<4x16xf32> to vector<4x16x1xf32>
    %20 = vector.broadcast %19 : vector<4x16x1xf32> to vector<4x16x128xf32>
    %21 = arith.divf %17, %20 : vector<4x16x128xf32>
    %22 = arith.truncf %21 : vector<4x16x128xf32> to vector<4x16x128xbf16>
    %c0_12 = arith.constant 0 : index
    %c0_13 = arith.constant 0 : index
    %c0_14 = arith.constant 0 : index
    %23 = vector.load %arg5[%c0_12, %c0_13, %c0_14] : memref<4x16x128xbf16, #tpu.memory_space<vmem>>, vector<4x16x128xbf16>
    tpu.vector_store %arg5[%c0_12, %c0_13, %c0_14], %22 {strides = array<i32>} : memref<4x16x128xbf16, #tpu.memory_space<vmem>>, vector<4x16x128xbf16>,
    %24 = arith.truncf %21 : vector<4x16x128xf32> to vector<4x16x128xbf16>
    "tpu.trace_start"() <{level = 10 : i32, message = "bqk,bkd->bqd"}> : () -> ()
    %cst_15 = arith.constant dense<0.000000e+00> : vector<4x16x32xf32>
    %25 = tpu.matmul %24, %4, %cst_15 {dimension_numbers = #tpu.dot_dimension_numbers<[2], [1], [1], [2], [0, 0, 0, 1, 1, 2], [0], [0]>} : vector<4x16x128xbf16>, vector<4x128x32xbf16>, vector<4x16x32xf32> -> vector<4x16x32xf32>
    "tpu.trace_stop"() : () -> ()
    %26 = vector.extract_strided_slice %25 {offsets = [0, 0, 0], sizes = [1, 16, 32], strides = [1, 1, 1]} : vector<4x16x32xf32> to vector<1x16x32xf32>
    %27 = vector.shape_cast %26 : vector<1x16x32xf32> to vector<16x32xf32>
    %c0_16 = arith.constant 0 : index
    %c0_17 = arith.constant 0 : index
    %c0_18 = arith.constant 0 : index
    %28 = vector.load %arg4[%c0_16, %c0_17, %c0_18] : memref<1x16x128xf32, #tpu.memory_space<vmem>>, vector<1x16x32xf32>
    %29 = vector.shape_cast %28 : vector<1x16x32xf32> to vector<16x32xf32>
    %30 = vector.shape_cast %27 : vector<16x32xf32> to vector<1x16x32xf32>
    tpu.vector_store %arg4[%c0_16, %c0_17, %c0_18], %30 {strides = array<i32>} : memref<1x16x128xf32, #tpu.memory_space<vmem>>, vector<1x16x32xf32>,
    %31 = vector.extract_strided_slice %25 {offsets = [1, 0, 0], sizes = [1, 16, 32], strides = [1, 1, 1]} : vector<4x16x32xf32> to vector<1x16x32xf32>
    %32 = vector.shape_cast %31 : vector<1x16x32xf32> to vector<16x32xf32>
    %c0_19 = arith.constant 0 : index
    %c0_20 = arith.constant 0 : index
    %c32 = arith.constant 32 : index
    %33 = vector.load %arg4[%c0_19, %c0_20, %c32] : memref<1x16x128xf32, #tpu.memory_space<vmem>>, vector<1x16x32xf32>
    %34 = vector.shape_cast %33 : vector<1x16x32xf32> to vector<16x32xf32>
    %35 = vector.shape_cast %32 : vector<16x32xf32> to vector<1x16x32xf32>
    tpu.vector_store %arg4[%c0_19, %c0_20, %c32], %35 {strides = array<i32>} : memref<1x16x128xf32, #tpu.memory_space<vmem>>, vector<1x16x32xf32>,
    %36 = vector.extract_strided_slice %25 {offsets = [2, 0, 0], sizes = [1, 16, 32], strides = [1, 1, 1]} : vector<4x16x32xf32> to vector<1x16x32xf32>
    %37 = vector.shape_cast %36 : vector<1x16x32xf32> to vector<16x32xf32>
    %c0_21 = arith.constant 0 : index
    %c0_22 = arith.constant 0 : index
    %c64 = arith.constant 64 : index
    %38 = vector.load %arg4[%c0_21, %c0_22, %c64] : memref<1x16x128xf32, #tpu.memory_space<vmem>>, vector<1x16x32xf32>
    %39 = vector.shape_cast %38 : vector<1x16x32xf32> to vector<16x32xf32>
    %40 = vector.shape_cast %37 : vector<16x32xf32> to vector<1x16x32xf32>
    tpu.vector_store %arg4[%c0_21, %c0_22, %c64], %40 {strides = array<i32>} : memref<1x16x128xf32, #tpu.memory_space<vmem>>, vector<1x16x32xf32>,
    %41 = vector.extract_strided_slice %25 {offsets = [3, 0, 0], sizes = [1, 16, 32], strides = [1, 1, 1]} : vector<4x16x32xf32> to vector<1x16x32xf32>
    %42 = vector.shape_cast %41 : vector<1x16x32xf32> to vector<16x32xf32>
    %c0_23 = arith.constant 0 : index
    %c0_24 = arith.constant 0 : index
    %c96 = arith.constant 96 : index
    %43 = vector.load %arg4[%c0_23, %c0_24, %c96] : memref<1x16x128xf32, #tpu.memory_space<vmem>>, vector<1x16x32xf32>
    %44 = vector.shape_cast %43 : vector<1x16x32xf32> to vector<16x32xf32>
    %45 = vector.shape_cast %42 : vector<16x32xf32> to vector<1x16x32xf32>
    tpu.vector_store %arg4[%c0_23, %c0_24, %c96], %45 {strides = array<i32>} : memref<1x16x128xf32, #tpu.memory_space<vmem>>, vector<1x16x32xf32>,
    return
  }
  func.func @transform_0(%arg0: i32) -> (i32, i32, i32) {
    %c0_i32 = arith.constant 0 : i32
    %c0_i32_0 = arith.constant 0 : i32
    %c0_i32_1 = arith.constant 0 : i32
    return %arg0, %c0_i32, %c0_i32_0 : i32, i32, i32
  }
  func.func @transform_1(%arg0: i32) -> (i32, i32, i32) {
    %c0_i32 = arith.constant 0 : i32
    %c0_i32_0 = arith.constant 0 : i32
    %c0_i32_1 = arith.constant 0 : i32
    return %arg0, %c0_i32, %c0_i32_0 : i32, i32, i32
  }
  func.func @transform_2(%arg0: i32) -> (i32, i32, i32) {
    %c0_i32 = arith.constant 0 : i32
    %c0_i32_0 = arith.constant 0 : i32
    %c0_i32_1 = arith.constant 0 : i32
    return %arg0, %c0_i32, %c0_i32_0 : i32, i32, i32
  }
  func.func @transform_3(%arg0: i32) -> (i32, i32, i32) {
    %c0_i32 = arith.constant 0 : i32
    %c0_i32_0 = arith.constant 0 : i32
    %c0_i32_1 = arith.constant 0 : i32
    return %arg0, %c0_i32, %c0_i32_0 : i32, i32, i32
  }
  func.func @transform_4(%arg0: i32) -> (i32, i32, i32) {
    %c0_i32 = arith.constant 0 : i32
    %c0_i32_0 = arith.constant 0 : i32
    %c0_i32_1 = arith.constant 0 : i32
    return %arg0, %c0_i32, %c0_i32_0 : i32, i32, i32
  }
}

</mosaic_0001>

<llo_original>
// kernel: tpu_custom_call.1
$region0: #{tpu_custom_call.1}
  #allocation0 [shape = 'u32[]', space=smem, size = 0x4, offset = 0x4, fixed_abs, tag = 'smem constant byte address 0x4 - core index']
  #allocation1 [shape = 'u32[144,128]{1,0:T(1,128)}', space=vmem, size = 0x12000, scoped, tag = 'internal scratch']
  %s0 = inlined_call_operand.vmem [shape: bf16[8,128,32], index: 0, kind: input, shape index: {}]
  %s1 = inlined_call_operand.vmem [shape: bf16[8,128,32], index: 1, kind: input, shape index: {}]
  %s2 = inlined_call_operand.vmem [shape: bf16[8,16,32], index: 2, kind: input, shape index: {}]
  %s3 = inlined_call_operand.hbm [shape: f32[2,16,128], index: 3, kind: output, shape index: {0}]
  %s4 = inlined_call_operand.hbm [shape: bf16[8,16,128], index: 4, kind: output, shape index: {1}]
  %5 = xla_tuple %s3, %s4
  %s6 = sld [smem:[#allocation0]]
  $region53: #{tpu_custom_call.1} parent=0
    _
  %s8 = ssub.s32 1, %s6
  %s9 = scalar_select 0, %s8, %s6
  $region1: #{tpu_custom_call.1} parent=0
    #allocation2 [shape = 'u8[16384]{0}', space=vmem, size = 0x4000, scoped, tag = 'output window, operand 0']
    #allocation3 [shape = 's32[2]{0}', space=sflag, size = 0x8, scoped, tag = 'scoped memory for tpu_custom_call.1']
    #allocation4 [shape = 'u8[32768]{0}', space=vmem, size = 0x8000, scoped, tag = 'output window, operand 1']
    #allocation5 [shape = 's32[2]{0}', space=sflag, size = 0x8, scoped, tag = 'scoped memory for tpu_custom_call.1']
    %10 = vsyncpa [#allocation3], 0
    %s11 = scalar_lea.sflag [#allocation3], 1
    %12 = vsyncpa %s11, 0
    %13 = vsyncpa [#allocation5], 0
    %s14 = scalar_lea.sflag [#allocation5], 1
    %15 = vsyncpa %s14, 0
    loop: start=0, step=1, limit=4
    $region2: #{tpu_custom_call.1} parent=1 // loop_pre_header
      _
    $region3: #{tpu_custom_call.1} parent=1 // loop_header
      %s17 = sphi 0, %s21
      %p18 = scmp.ge.s32.totalorder %s17, 4
      %s27 = sphi 0, %s29
      %s30 = sphi 0, %s27
      %s31 = sphi 0, %s30
      %s47 = sphi 0, %s31
      %s53 = sphi 0, %s55
      %s56 = sphi 0, %s53
      %s57 = sphi 0, %s56
      %s73 = sphi 0, %s57
      %s79 = sphi 0, %s81
      %s82 = sphi 0, %s79
      %s83 = sphi 0, %s82
      %s99 = sphi 0, %s83
      %s105 = sphi 0, %s107
      %s108 = sphi 0, %s105
      %s109 = sphi 0, %s108
      %s125 = sphi 0, %s109
      %s131 = sphi 0, %s133
      %s134 = sphi 0, %s131
      %s135 = sphi 0, %s134
      %s151 = sphi 0, %s135
    $region4: #{tpu_custom_call.1} parent=1 // loop_header_branch
      %20 = sbr.rel (%p18) target = $region8
    $region5: #{tpu_custom_call.1} parent=1 // loop_body
      %s22 = ssub.s32 %s17, 1
      %s23 = ssub.s32 %s17, 2
      %s24 = sadd.s32 %s17, 1
      %s25 = ssub.s32 %s17, %s24
      %p26 = scmp.eq.s32.totalorder %s25, 0
      %s28 = sadd.s32 %s27, 1
      %s29 = scalar_select %p26, %s27, %s28
      %p32 = pneg %p26
      %p33 = scmp.eq.s32.totalorder %s17, 1
      %p34 = por %p32, %p33
      %p35 = scmp.ne.s32.totalorder %s27, %s30
      %p36 = scmp.eq.s32.totalorder %s17, 0
      %p37 = por %p35, %p36
      %p38 = scmp.ne.s32.totalorder %s27, %s30
      %p39 = scmp.eq.s32.totalorder %s22, 1
      %p40 = por %p38, %p39
      %p41 = scmp.ne.s32.totalorder %s30, %s31
      %p42 = scmp.eq.s32.totalorder %s22, 0
      %p43 = por %p41, %p42
      %p44 = scmp.ne.s32.totalorder %s30, %s31
      %p45 = scmp.eq.s32.totalorder %s23, 1
      %p46 = por %p44, %p45
      %p48 = scmp.ne.s32.totalorder %s31, %s47
      %p49 = scmp.eq.s32.totalorder %s23, 0
      %p50 = por %p48, %p49
      %s51 = ssub.s32 %s17, %s24
      %p52 = scmp.eq.s32.totalorder %s51, 0
      %s54 = sadd.s32 %s53, 1
      %s55 = scalar_select %p52, %s53, %s54
      %p58 = pneg %p52
      %p59 = scmp.eq.s32.totalorder %s17, 1
      %p60 = por %p58, %p59
      %p61 = scmp.ne.s32.totalorder %s53, %s56
      %p62 = scmp.eq.s32.totalorder %s17, 0
      %p63 = por %p61, %p62
      %p64 = scmp.ne.s32.totalorder %s53, %s56
      %p65 = scmp.eq.s32.totalorder %s22, 1
      %p66 = por %p64, %p65
      %p67 = scmp.ne.s32.totalorder %s56, %s57
      %p68 = scmp.eq.s32.totalorder %s22, 0
      %p69 = por %p67, %p68
      %p70 = scmp.ne.s32.totalorder %s56, %s57
      %p71 = scmp.eq.s32.totalorder %s23, 1
      %p72 = por %p70, %p71
      %p74 = scmp.ne.s32.totalorder %s57, %s73
      %p75 = scmp.eq.s32.totalorder %s23, 0
      %p76 = por %p74, %p75
      %s77 = ssub.s32 %s17, %s24
      %p78 = scmp.eq.s32.totalorder %s77, 0
      %s80 = sadd.s32 %s79, 1
      %s81 = scalar_select %p78, %s79, %s80
      %p84 = pneg %p78
      %p85 = scmp.eq.s32.totalorder %s17, 1
      %p86 = por %p84, %p85
      %p87 = scmp.ne.s32.totalorder %s79, %s82
      %p88 = scmp.eq.s32.totalorder %s17, 0
      %p89 = por %p87, %p88
      %p90 = scmp.ne.s32.totalorder %s79, %s82
      %p91 = scmp.eq.s32.totalorder %s22, 1
      %p92 = por %p90, %p91
      %p93 = scmp.ne.s32.totalorder %s82, %s83
      %p94 = scmp.eq.s32.totalorder %s22, 0
      %p95 = por %p93, %p94
      %p96 = scmp.ne.s32.totalorder %s82, %s83
      %p97 = scmp.eq.s32.totalorder %s23, 1
      %p98 = por %p96, %p97
      %p100 = scmp.ne.s32.totalorder %s83, %s99
      %p101 = scmp.eq.s32.totalorder %s23, 0
      %p102 = por %p100, %p101
      %s103 = ssub.s32 %s17, %s24
      %p104 = scmp.eq.s32.totalorder %s103, 0
      %s106 = sadd.s32 %s105, 1
      %s107 = scalar_select %p104, %s105, %s106
      %p110 = pneg %p104
      %p111 = scmp.eq.s32.totalorder %s17, 1
      %p112 = por %p110, %p111
      %p113 = scmp.ne.s32.totalorder %s105, %s108
      %p114 = scmp.eq.s32.totalorder %s17, 0
      %p115 = por %p113, %p114
      %p116 = scmp.ne.s32.totalorder %s105, %s108
      %p117 = scmp.eq.s32.totalorder %s22, 1
      %p118 = por %p116, %p117
      %p119 = scmp.ne.s32.totalorder %s108, %s109
      %p120 = scmp.eq.s32.totalorder %s22, 0
      %p121 = por %p119, %p120
      %p122 = scmp.ne.s32.totalorder %s108, %s109
      %p123 = scmp.eq.s32.totalorder %s23, 1
      %p124 = por %p122, %p123
      %p126 = scmp.ne.s32.totalorder %s109, %s125
      %p127 = scmp.eq.s32.totalorder %s23, 0
      %p128 = por %p126, %p127
      %s129 = ssub.s32 %s17, %s24
      %p130 = scmp.eq.s32.totalorder %s129, 0
      %s132 = sadd.s32 %s131, 1
      %s133 = scalar_select %p130, %s131, %s132
      %p136 = pneg %p130
      %p137 = scmp.eq.s32.totalorder %s17, 1
      %p138 = por %p136, %p137
      %p139 = scmp.ne.s32.totalorder %s131, %s134
      %p140 = scmp.eq.s32.totalorder %s17, 0
      %p141 = por %p139, %p140
      %p142 = scmp.ne.s32.totalorder %s131, %s134
      %p143 = scmp.eq.s32.totalorder %s22, 1
      %p144 = por %p142, %p143
      %p145 = scmp.ne.s32.totalorder %s134, %s135
      %p146 = scmp.eq.s32.totalorder %s22, 0
      %p147 = por %p145, %p146
      %p148 = scmp.ne.s32.totalorder %s134, %s135
      %p149 = scmp.eq.s32.totalorder %s23, 1
      %p150 = por %p148, %p149
      %p152 = scmp.ne.s32.totalorder %s135, %s151
      %p153 = scmp.eq.s32.totalorder %s23, 0
      %p154 = por %p152, %p153
      %p155 = scmp.le.s32.totalorder 1, %s17
      %p156 = scmp.lt.s32.totalorder %s17, 3
      %p157 = pnand %p155, %p156
      %p158 = pneg %p157
      // Predicated region
      $region9: #{tpu_custom_call.1} parent=5 // pred_check
        _
      $region10: #{tpu_custom_call.1} parent=5 // pred_check_branch
        %160 = sbr.rel (%p157) target = $region12
      $region11: #{tpu_custom_call.1} parent=5 // pred_region
        %s161 = ssub.s32 %s17, 1
      $region12: #{tpu_custom_call.1} parent=5 // pred_fallthru
        _
      %p162 = scmp.lt.s32.totalorder %s17, 2
      // Predicated region
      $region13: #{tpu_custom_call.1} parent=5 // pred_check
        %p163 = pneg %p162
      $region14: #{tpu_custom_call.1} parent=5 // pred_check_branch
        %165 = sbr.rel (%p163) target = $region16
      $region15: #{tpu_custom_call.1} parent=5 // pred_region
        // Predicated region
        $region17: #{tpu_custom_call.1} parent=15 // pred_check
          %p166 = pneg %p37
        $region18: #{tpu_custom_call.1} parent=15 // pred_check_branch
          %168 = sbr.rel (%p166) target = $region20
        $region19: #{tpu_custom_call.1} parent=15 // pred_region
          %s169 = smul.u32 4, %s17
          %p170 = scmp.lt.s32.totalorder %s169, 7
          %s171 = scalar_select %p170, %s169, 7
          %s172 = smul.addr %s171, 16
          %s173 = smul.addr %s172, 4
          %s174 = scalar_lea.vmem %s0, %s173
          %s175 = smul.u32 4, %s17
        $region20: #{tpu_custom_call.1} parent=15 // pred_fallthru
          _
        // Predicated region
        $region21: #{tpu_custom_call.1} parent=15 // pred_check
          %p176 = pneg %p63
        $region22: #{tpu_custom_call.1} parent=15 // pred_check_branch
          %178 = sbr.rel (%p176) target = $region24
        $region23: #{tpu_custom_call.1} parent=15 // pred_region
          %s179 = smul.u32 4, %s17
          %p180 = scmp.lt.s32.totalorder %s179, 7
          %s181 = scalar_select %p180, %s179, 7
          %s182 = smul.addr %s181, 16
          %s183 = smul.addr %s182, 4
          %s184 = scalar_lea.vmem %s1, %s183
          %s185 = smul.u32 4, %s17
        $region24: #{tpu_custom_call.1} parent=15 // pred_fallthru
          _
        // Predicated region
        $region25: #{tpu_custom_call.1} parent=15 // pred_check
          %p186 = pneg %p89
        $region26: #{tpu_custom_call.1} parent=15 // pred_check_branch
          %188 = sbr.rel (%p186) target = $region28
        $region27: #{tpu_custom_call.1} parent=15 // pred_region
          %s189 = smul.u32 4, %s17
          %p190 = scmp.lt.s32.totalorder %s189, 7
          %s191 = scalar_select %p190, %s189, 7
          %s192 = smul.addr %s191, 2
          %s193 = smul.addr %s192, 4
          %s194 = scalar_lea.vmem %s2, %s193
          %s195 = smul.u32 4, %s17
        $region28: #{tpu_custom_call.1} parent=15 // pred_fallthru
          _
      $region16: #{tpu_custom_call.1} parent=5 // pred_fallthru
        _
      %p196 = scmp.le.s32.totalorder 1, %s17
      %p197 = scmp.lt.s32.totalorder %s17, 3
      %p198 = pnand %p196, %p197
      %p199 = pneg %p198
      // Predicated region
      $region29: #{tpu_custom_call.1} parent=5 // pred_check
        _
      $region30: #{tpu_custom_call.1} parent=5 // pred_check_branch
        %201 = sbr.rel (%p198) target = $region32
      $region31: #{tpu_custom_call.1} parent=5 // pred_region
        %s202 = ssub.s32 %s17, 1
        %s203 = smul.u32 4, %s22
        %p204 = scmp.lt.s32.totalorder %s203, 7
        %s205 = scalar_select %p204, %s203, 7
        %s206 = smul.addr %s205, 16
        %s207 = smul.addr %s206, 4
        %s208 = scalar_lea.vmem %s0, %s207
        %p209 = pneg %p43
        %p210 = pneg %p40
        %s211 = smul.u32 4, %s22
        %p212 = scmp.lt.s32.totalorder %s211, 7
        %s213 = scalar_select %p212, %s211, 7
        %s214 = smul.addr %s213, 16
        %s215 = smul.addr %s214, 4
        %s216 = scalar_lea.vmem %s1, %s215
        %p217 = pneg %p69
        %p218 = pneg %p66
        %s219 = smul.u32 4, %s22
        %p220 = scmp.lt.s32.totalorder %s219, 7
        %s221 = scalar_select %p220, %s219, 7
        %s222 = smul.addr %s221, 2
        %s223 = smul.addr %s222, 4
        %s224 = scalar_lea.vmem %s2, %s223
        %p225 = pneg %p95
        %p226 = pneg %p92
        %p227 = pneg %p121
        %p228 = pneg %p118
        %s229 = sand.u32 %s108, 1
        %s230 = scalar_lea.sflag [#allocation3], %s229
        %s231 = sand.u32 %s108, 1
        %s232 = smul.addr %s231, 16
        %s233 = scalar_lea.vmem [#allocation2], %s232
        %p234 = pneg %p147
        %p235 = pneg %p144
        %s236 = sand.u32 %s134, 1
        %s237 = scalar_lea.sflag [#allocation5], %s236
        %s238 = sand.u32 %s134, 1
        %s239 = smul.addr %s238, 32
        %s240 = scalar_lea.vmem [#allocation4], %s239
        %s241 = smul.u32 4, %s22
        %p242 = scmp.lt.s32.totalorder %s241, 7
        %s243 = scalar_select %p242, %s241, 7
        %s244 = smul.addr %s243, 16
        %s245 = smul.addr %s244, 4
        %s246 = scalar_lea.vmem %s0, %s245
        %s247 = smul.u32 4, %s22
        %s248 = smul.u32 4, %s22
        %p249 = scmp.lt.s32.totalorder %s248, 7
        %s250 = scalar_select %p249, %s248, 7
        %s251 = smul.addr %s250, 16
        %s252 = smul.addr %s251, 4
        %s253 = scalar_lea.vmem %s1, %s252
        %s254 = smul.u32 4, %s22
        %s255 = smul.u32 4, %s22
        %p256 = scmp.lt.s32.totalorder %s255, 7
        %s257 = scalar_select %p256, %s255, 7
        %s258 = smul.addr %s257, 2
        %s259 = smul.addr %s258, 4
        %s260 = scalar_lea.vmem %s2, %s259
        %s261 = smul.u32 4, %s22
        %s262 = smul.u32 4, %s22
        %v265 = vld [vmem:[%s260] sm:$0xf]
        %v266 = vld [vmem:[%s260 + $0x4] sm:$0xf]
        %v267 = vld [vmem:[%s260 + $0x8] sm:$0xf]
        %v268 = vld [vmem:[%s260 + $0xc] sm:$0xf]
        %v269 = vld [vmem:[%s260 + $0x10] sm:$0xf]
        %v270 = vld [vmem:[%s260 + $0x14] sm:$0xf]
        %v271 = vld [vmem:[%s260 + $0x18] sm:$0xf]
        %v272 = vld [vmem:[%s260 + $0x1c] sm:$0xf]
        %v273 = vmul.bf16 %v265, 1043676725
        %v274 = vmul.bf16 %v266, 1043676725
        %v275 = vmul.bf16 %v267, 1043676725
        %v276 = vmul.bf16 %v268, 1043676725
        %v277 = vmul.bf16 %v269, 1043676725
        %v278 = vmul.bf16 %v270, 1043676725
        %v279 = vmul.bf16 %v271, 1043676725
        %v280 = vmul.bf16 %v272, 1043676725
        %v281 = vld [vmem:[%s246] sm:$0xf]
        %v282 = vld [vmem:[%s246 + $0x4] sm:$0xf]
        %v283 = vld [vmem:[%s246 + $0x8] sm:$0xf]
        %v284 = vld [vmem:[%s246 + $0xc] sm:$0xf]
        %v285 = vld [vmem:[%s246 + $0x10] sm:$0xf]
        %v286 = vld [vmem:[%s246 + $0x14] sm:$0xf]
        %v287 = vld [vmem:[%s246 + $0x18] sm:$0xf]
        %v288 = vld [vmem:[%s246 + $0x1c] sm:$0xf]
        %v289 = vld [vmem:[%s246 + $0x20] sm:$0xf]
        %v290 = vld [vmem:[%s246 + $0x24] sm:$0xf]
        %v291 = vld [vmem:[%s246 + $0x28] sm:$0xf]
        %v292 = vld [vmem:[%s246 + $0x2c] sm:$0xf]
        %v293 = vld [vmem:[%s246 + $0x30] sm:$0xf]
        %v294 = vld [vmem:[%s246 + $0x34] sm:$0xf]
        %v295 = vld [vmem:[%s246 + $0x38] sm:$0xf]
        %v296 = vld [vmem:[%s246 + $0x3c] sm:$0xf]
        %v297 = vld [vmem:[%s246 + $0x40] sm:$0xf]
        %v298 = vld [vmem:[%s246 + $0x44] sm:$0xf]
        %v299 = vld [vmem:[%s246 + $0x48] sm:$0xf]
        %v300 = vld [vmem:[%s246 + $0x4c] sm:$0xf]
        %v301 = vld [vmem:[%s246 + $0x50] sm:$0xf]
        %v302 = vld [vmem:[%s246 + $0x54] sm:$0xf]
        %v303 = vld [vmem:[%s246 + $0x58] sm:$0xf]
        %v304 = vld [vmem:[%s246 + $0x5c] sm:$0xf]
        %v305 = vld [vmem:[%s246 + $0x60] sm:$0xf]
        %v306 = vld [vmem:[%s246 + $0x64] sm:$0xf]
        %v307 = vld [vmem:[%s246 + $0x68] sm:$0xf]
        %v308 = vld [vmem:[%s246 + $0x6c] sm:$0xf]
        %v309 = vld [vmem:[%s246 + $0x70] sm:$0xf]
        %v310 = vld [vmem:[%s246 + $0x74] sm:$0xf]
        %v311 = vld [vmem:[%s246 + $0x78] sm:$0xf]
        %v312 = vld [vmem:[%s246 + $0x7c] sm:$0xf]
        %v313 = vld [vmem:[%s246 + $0x80] sm:$0xf]
        %v314 = vld [vmem:[%s246 + $0x84] sm:$0xf]
        %v315 = vld [vmem:[%s246 + $0x88] sm:$0xf]
        %v316 = vld [vmem:[%s246 + $0x8c] sm:$0xf]
        %v317 = vld [vmem:[%s246 + $0x90] sm:$0xf]
        %v318 = vld [vmem:[%s246 + $0x94] sm:$0xf]
        %v319 = vld [vmem:[%s246 + $0x98] sm:$0xf]
        %v320 = vld [vmem:[%s246 + $0x9c] sm:$0xf]
        %v321 = vld [vmem:[%s246 + $0xa0] sm:$0xf]
        %v322 = vld [vmem:[%s246 + $0xa4] sm:$0xf]
        %v323 = vld [vmem:[%s246 + $0xa8] sm:$0xf]
        %v324 = vld [vmem:[%s246 + $0xac] sm:$0xf]
        %v325 = vld [vmem:[%s246 + $0xb0] sm:$0xf]
        %v326 = vld [vmem:[%s246 + $0xb4] sm:$0xf]
        %v327 = vld [vmem:[%s246 + $0xb8] sm:$0xf]
        %v328 = vld [vmem:[%s246 + $0xbc] sm:$0xf]
        %v329 = vld [vmem:[%s246 + $0xc0] sm:$0xf]
        %v330 = vld [vmem:[%s246 + $0xc4] sm:$0xf]
        %v331 = vld [vmem:[%s246 + $0xc8] sm:$0xf]
        %v332 = vld [vmem:[%s246 + $0xcc] sm:$0xf]
        %v333 = vld [vmem:[%s246 + $0xd0] sm:$0xf]
        %v334 = vld [vmem:[%s246 + $0xd4] sm:$0xf]
        %v335 = vld [vmem:[%s246 + $0xd8] sm:$0xf]
        %v336 = vld [vmem:[%s246 + $0xdc] sm:$0xf]
        %v337 = vld [vmem:[%s246 + $0xe0] sm:$0xf]
        %v338 = vld [vmem:[%s246 + $0xe4] sm:$0xf]
        %v339 = vld [vmem:[%s246 + $0xe8] sm:$0xf]
        %v340 = vld [vmem:[%s246 + $0xec] sm:$0xf]
        %v341 = vld [vmem:[%s246 + $0xf0] sm:$0xf]
        %v342 = vld [vmem:[%s246 + $0xf4] sm:$0xf]
        %v343 = vld [vmem:[%s246 + $0xf8] sm:$0xf]
        %v344 = vld [vmem:[%s246 + $0xfc] sm:$0xf]
        %v345 = vld [vmem:[%s253] sm:$0xf]
        %v346 = vld [vmem:[%s253 + $0x4] sm:$0xf]
        %v347 = vld [vmem:[%s253 + $0x8] sm:$0xf]
        %v348 = vld [vmem:[%s253 + $0xc] sm:$0xf]
        %v349 = vld [vmem:[%s253 + $0x10] sm:$0xf]
        %v350 = vld [vmem:[%s253 + $0x14] sm:$0xf]
        %v351 = vld [vmem:[%s253 + $0x18] sm:$0xf]
        %v352 = vld [vmem:[%s253 + $0x1c] sm:$0xf]
        %v353 = vld [vmem:[%s253 + $0x20] sm:$0xf]
        %v354 = vld [vmem:[%s253 + $0x24] sm:$0xf]
        %v355 = vld [vmem:[%s253 + $0x28] sm:$0xf]
        %v356 = vld [vmem:[%s253 + $0x2c] sm:$0xf]
        %v357 = vld [vmem:[%s253 + $0x30] sm:$0xf]
        %v358 = vld [vmem:[%s253 + $0x34] sm:$0xf]
        %v359 = vld [vmem:[%s253 + $0x38] sm:$0xf]
        %v360 = vld [vmem:[%s253 + $0x3c] sm:$0xf]
        %v361 = vld [vmem:[%s253 + $0x40] sm:$0xf]
        %v362 = vld [vmem:[%s253 + $0x44] sm:$0xf]
        %v363 = vld [vmem:[%s253 + $0x48] sm:$0xf]
        %v364 = vld [vmem:[%s253 + $0x4c] sm:$0xf]
        %v365 = vld [vmem:[%s253 + $0x50] sm:$0xf]
        %v366 = vld [vmem:[%s253 + $0x54] sm:$0xf]
        %v367 = vld [vmem:[%s253 + $0x58] sm:$0xf]
        %v368 = vld [vmem:[%s253 + $0x5c] sm:$0xf]
        %v369 = vld [vmem:[%s253 + $0x60] sm:$0xf]
        %v370 = vld [vmem:[%s253 + $0x64] sm:$0xf]
        %v371 = vld [vmem:[%s253 + $0x68] sm:$0xf]
        %v372 = vld [vmem:[%s253 + $0x6c] sm:$0xf]
        %v373 = vld [vmem:[%s253 + $0x70] sm:$0xf]
        %v374 = vld [vmem:[%s253 + $0x74] sm:$0xf]
        %v375 = vld [vmem:[%s253 + $0x78] sm:$0xf]
        %v376 = vld [vmem:[%s253 + $0x7c] sm:$0xf]
        %v377 = vld [vmem:[%s253 + $0x80] sm:$0xf]
        %v378 = vld [vmem:[%s253 + $0x84] sm:$0xf]
        %v379 = vld [vmem:[%s253 + $0x88] sm:$0xf]
        %v380 = vld [vmem:[%s253 + $0x8c] sm:$0xf]
        %v381 = vld [vmem:[%s253 + $0x90] sm:$0xf]
        %v382 = vld [vmem:[%s253 + $0x94] sm:$0xf]
        %v383 = vld [vmem:[%s253 + $0x98] sm:$0xf]
        %v384 = vld [vmem:[%s253 + $0x9c] sm:$0xf]
        %v385 = vld [vmem:[%s253 + $0xa0] sm:$0xf]
        %v386 = vld [vmem:[%s253 + $0xa4] sm:$0xf]
        %v387 = vld [vmem:[%s253 + $0xa8] sm:$0xf]
        %v388 = vld [vmem:[%s253 + $0xac] sm:$0xf]
        %v389 = vld [vmem:[%s253 + $0xb0] sm:$0xf]
        %v390 = vld [vmem:[%s253 + $0xb4] sm:$0xf]
        %v391 = vld [vmem:[%s253 + $0xb8] sm:$0xf]
        %v392 = vld [vmem:[%s253 + $0xbc] sm:$0xf]
        %v393 = vld [vmem:[%s253 + $0xc0] sm:$0xf]
        %v394 = vld [vmem:[%s253 + $0xc4] sm:$0xf]
        %v395 = vld [vmem:[%s253 + $0xc8] sm:$0xf]
        %v396 = vld [vmem:[%s253 + $0xcc] sm:$0xf]
        %v397 = vld [vmem:[%s253 + $0xd0] sm:$0xf]
        %v398 = vld [vmem:[%s253 + $0xd4] sm:$0xf]
        %v399 = vld [vmem:[%s253 + $0xd8] sm:$0xf]
        %v400 = vld [vmem:[%s253 + $0xdc] sm:$0xf]
        %v401 = vld [vmem:[%s253 + $0xe0] sm:$0xf]
        %v402 = vld [vmem:[%s253 + $0xe4] sm:$0xf]
        %v403 = vld [vmem:[%s253 + $0xe8] sm:$0xf]
        %v404 = vld [vmem:[%s253 + $0xec] sm:$0xf]
        %v405 = vld [vmem:[%s253 + $0xf0] sm:$0xf]
        %v406 = vld [vmem:[%s253 + $0xf4] sm:$0xf]
        %v407 = vld [vmem:[%s253 + $0xf8] sm:$0xf]
        %v408 = vld [vmem:[%s253 + $0xfc] sm:$0xf]
        %v411 = vunpack.c.l.b16 %v273
        %v412 = vunpack.c.l.b16 %v274
        %v413 = vpack.c.b16 %v412, %v411
        %v430 = vunpack.c.l.b16 %v281
        %v431 = vunpack.c.l.b16 %v282
        %v432 = vunpack.c.l.b16 %v283
        %v433 = vunpack.c.l.b16 %v284
        %v434 = vunpack.c.l.b16 %v285
        %v435 = vunpack.c.l.b16 %v286
        %v436 = vunpack.c.l.b16 %v287
        %v437 = vunpack.c.l.b16 %v288
        %v438 = vunpack.c.l.b16 %v289
        %v439 = vunpack.c.l.b16 %v290
        %v440 = vunpack.c.l.b16 %v291
        %v441 = vunpack.c.l.b16 %v292
        %v442 = vunpack.c.l.b16 %v293
        %v443 = vunpack.c.l.b16 %v294
        %v444 = vunpack.c.l.b16 %v295
        %v445 = vunpack.c.l.b16 %v296
        %v446 = vpack.c.b16 %v431, %v430
        %v447 = vpack.c.b16 %v433, %v432
        %v448 = vpack.c.b16 %v435, %v434
        %v449 = vpack.c.b16 %v437, %v436
        %v450 = vpack.c.b16 %v439, %v438
        %v451 = vpack.c.b16 %v441, %v440
        %v452 = vpack.c.b16 %v443, %v442
        %v453 = vpack.c.b16 %v445, %v444
        %vm454 = vcmask 261120
        %v456 = vsel %vm454, %v413, 0
        %v459 = vsel %vm454, %v446, 0
        %v462 = vsel %vm454, %v447, 0
        %v465 = vsel %vm454, %v448, 0
        %v468 = vsel %vm454, %v449, 0
        %v471 = vsel %vm454, %v450, 0
        %v474 = vsel %vm454, %v451, 0
        %v477 = vsel %vm454, %v452, 0
        %v480 = vsel %vm454, %v453, 0
        %482 = vmatprep.subr.bf16.mxu0 0
        %483 = vmatpush1.bf16.xpose.msra.mxu0 %v480
        %484 = vmatprep.subr.bf16.mxu0 0
        %485 = vmatpush1.bf16.xpose.msra.mxu0 %v477
        %486 = vmatprep.subr.bf16.mxu0 0
        %487 = vmatpush1.bf16.xpose.msra.mxu0 %v474
        %488 = vmatprep.subr.bf16.mxu0 0
        %489 = vmatpush1.bf16.xpose.msra.mxu0 %v471
        %490 = vmatprep.subr.bf16.mxu0 0
        %491 = vmatpush1.bf16.xpose.msra.mxu0 %v468
        %492 = vmatprep.subr.bf16.mxu0 0
        %493 = vmatpush1.bf16.xpose.msra.mxu0 %v465
        %494 = vmatprep.subr.bf16.mxu0 0
        %495 = vmatpush1.bf16.xpose.msra.mxu0 %v462
        %496 = vmatprep.subr.bf16.mxu0 0
        %497 = vmatpush1.bf16.xpose.msra.mxu0 %v459
        %498 = vmatprep.subr.bf16.mxu0 0
        %499 = vmatpush2.bf16.xpose.msra.mxu0 0
        %500 = vmatprep.subr.bf16.mxu0 0
        %501 = vmatpush2.bf16.xpose.msra.mxu0 0
        %502 = vmatprep.subr.bf16.mxu0 0
        %503 = vmatpush2.bf16.xpose.msra.mxu0 0
        %504 = vmatprep.subr.bf16.mxu0 0
        %505 = vmatpush2.bf16.xpose.msra.mxu0 0
        %506 = vmatprep.subr.bf16.mxu0 0
        %507 = vmatpush2.bf16.xpose.msra.mxu0 0
        %508 = vmatprep.subr.bf16.mxu0 0
        %509 = vmatpush2.bf16.xpose.msra.mxu0 0
        %510 = vmatprep.subr.bf16.mxu0 0
        %511 = vmatpush2.bf16.xpose.msra.mxu0 0
        %512 = vmatprep.subr.bf16.mxu0 0
        %513 = vmatpush2.bf16.xpose.msra.mxu0 0
        %514 = vmatprep.mubr.bf16.mxu0 0
        %515 = vmatmul.mubr.bf16.gmra.mxu0 %v456
        %v516 = vpop.f32.mrf.mxu0
        %v517 = vadd.f32 0.0, %v516
        %v518 = vpop.f32.mrf.mxu0
        %v519 = vpop.f32.mrf.mxu0
        %v520 = vadd.f32 0.0, %v519
        %v521 = vpop.f32.mrf.mxu0
        %522 = vdwg.mxu0
        %v525 = vunpack.c.l.b16 %v275
        %v526 = vunpack.c.l.b16 %v276
        %v527 = vpack.c.b16 %v526, %v525
        %v544 = vunpack.c.l.b16 %v297
        %v545 = vunpack.c.l.b16 %v298
        %v546 = vunpack.c.l.b16 %v299
        %v547 = vunpack.c.l.b16 %v300
        %v548 = vunpack.c.l.b16 %v301
        %v549 = vunpack.c.l.b16 %v302
        %v550 = vunpack.c.l.b16 %v303
        %v551 = vunpack.c.l.b16 %v304
        %v552 = vunpack.c.l.b16 %v305
        %v553 = vunpack.c.l.b16 %v306
        %v554 = vunpack.c.l.b16 %v307
        %v555 = vunpack.c.l.b16 %v308
        %v556 = vunpack.c.l.b16 %v309
        %v557 = vunpack.c.l.b16 %v310
        %v558 = vunpack.c.l.b16 %v311
        %v559 = vunpack.c.l.b16 %v312
        %v560 = vpack.c.b16 %v545, %v544
        %v561 = vpack.c.b16 %v547, %v546
        %v562 = vpack.c.b16 %v549, %v548
        %v563 = vpack.c.b16 %v551, %v550
        %v564 = vpack.c.b16 %v553, %v552
        %v565 = vpack.c.b16 %v555, %v554
        %v566 = vpack.c.b16 %v557, %v556
        %v567 = vpack.c.b16 %v559, %v558
        %v569 = vsel %vm454, %v527, 0
        %v572 = vsel %vm454, %v560, 0
        %v575 = vsel %vm454, %v561, 0
        %v578 = vsel %vm454, %v562, 0
        %v581 = vsel %vm454, %v563, 0
        %v584 = vsel %vm454, %v564, 0
        %v587 = vsel %vm454, %v565, 0
        %v590 = vsel %vm454, %v566, 0
        %v593 = vsel %vm454, %v567, 0
        %595 = vmatprep.subr.bf16.mxu0 0
        %596 = vmatpush1.bf16.xpose.msra.mxu0 %v593
        %597 = vmatprep.subr.bf16.mxu0 0
        %598 = vmatpush1.bf16.xpose.msra.mxu0 %v590
        %599 = vmatprep.subr.bf16.mxu0 0
        %600 = vmatpush1.bf16.xpose.msra.mxu0 %v587
        %601 = vmatprep.subr.bf16.mxu0 0
        %602 = vmatpush1.bf16.xpose.msra.mxu0 %v584
        %603 = vmatprep.subr.bf16.mxu0 0
        %604 = vmatpush1.bf16.xpose.msra.mxu0 %v581
        %605 = vmatprep.subr.bf16.mxu0 0
        %606 = vmatpush1.bf16.xpose.msra.mxu0 %v578
        %607 = vmatprep.subr.bf16.mxu0 0
        %608 = vmatpush1.bf16.xpose.msra.mxu0 %v575
        %609 = vmatprep.subr.bf16.mxu0 0
        %610 = vmatpush1.bf16.xpose.msra.mxu0 %v572
        %611 = vmatprep.subr.bf16.mxu0 0
        %612 = vmatpush2.bf16.xpose.msra.mxu0 0
        %613 = vmatprep.subr.bf16.mxu0 0
        %614 = vmatpush2.bf16.xpose.msra.mxu0 0
        %615 = vmatprep.subr.bf16.mxu0 0
        %616 = vmatpush2.bf16.xpose.msra.mxu0 0
        %617 = vmatprep.subr.bf16.mxu0 0
        %618 = vmatpush2.bf16.xpose.msra.mxu0 0
        %619 = vmatprep.subr.bf16.mxu0 0
        %620 = vmatpush2.bf16.xpose.msra.mxu0 0
        %621 = vmatprep.subr.bf16.mxu0 0
        %622 = vmatpush2.bf16.xpose.msra.mxu0 0
        %623 = vmatprep.subr.bf16.mxu0 0
        %624 = vmatpush2.bf16.xpose.msra.mxu0 0
        %625 = vmatprep.subr.bf16.mxu0 0
        %626 = vmatpush2.bf16.xpose.msra.mxu0 0
        %627 = vmatprep.mubr.bf16.mxu0 0
        %628 = vmatmul.mubr.bf16.gmra.mxu0 %v569
        %v629 = vpop.f32.mrf.mxu0
        %v630 = vadd.f32 0.0, %v629
        %v631 = vpop.f32.mrf.mxu0
        %v632 = vpop.f32.mrf.mxu0
        %v633 = vadd.f32 0.0, %v632
        %v634 = vpop.f32.mrf.mxu0
        %635 = vdwg.mxu0
        %v638 = vunpack.c.l.b16 %v277
        %v639 = vunpack.c.l.b16 %v278
        %v640 = vpack.c.b16 %v639, %v638
        %v657 = vunpack.c.l.b16 %v313
        %v658 = vunpack.c.l.b16 %v314
        %v659 = vunpack.c.l.b16 %v315
        %v660 = vunpack.c.l.b16 %v316
        %v661 = vunpack.c.l.b16 %v317
        %v662 = vunpack.c.l.b16 %v318
        %v663 = vunpack.c.l.b16 %v319
        %v664 = vunpack.c.l.b16 %v320
        %v665 = vunpack.c.l.b16 %v321
        %v666 = vunpack.c.l.b16 %v322
        %v667 = vunpack.c.l.b16 %v323
        %v668 = vunpack.c.l.b16 %v324
        %v669 = vunpack.c.l.b16 %v325
        %v670 = vunpack.c.l.b16 %v326
        %v671 = vunpack.c.l.b16 %v327
        %v672 = vunpack.c.l.b16 %v328
        %v673 = vpack.c.b16 %v658, %v657
        %v674 = vpack.c.b16 %v660, %v659
        %v675 = vpack.c.b16 %v662, %v661
        %v676 = vpack.c.b16 %v664, %v663
        %v677 = vpack.c.b16 %v666, %v665
        %v678 = vpack.c.b16 %v668, %v667
        %v679 = vpack.c.b16 %v670, %v669
        %v680 = vpack.c.b16 %v672, %v671
        %v682 = vsel %vm454, %v640, 0
        %v685 = vsel %vm454, %v673, 0
        %v688 = vsel %vm454, %v674, 0
        %v691 = vsel %vm454, %v675, 0
        %v694 = vsel %vm454, %v676, 0
        %v697 = vsel %vm454, %v677, 0
        %v700 = vsel %vm454, %v678, 0
        %v703 = vsel %vm454, %v679, 0
        %v706 = vsel %vm454, %v680, 0
        %708 = vmatprep.subr.bf16.mxu0 0
        %709 = vmatpush1.bf16.xpose.msra.mxu0 %v706
        %710 = vmatprep.subr.bf16.mxu0 0
        %711 = vmatpush1.bf16.xpose.msra.mxu0 %v703
        %712 = vmatprep.subr.bf16.mxu0 0
        %713 = vmatpush1.bf16.xpose.msra.mxu0 %v700
        %714 = vmatprep.subr.bf16.mxu0 0
        %715 = vmatpush1.bf16.xpose.msra.mxu0 %v697
        %716 = vmatprep.subr.bf16.mxu0 0
        %717 = vmatpush1.bf16.xpose.msra.mxu0 %v694
        %718 = vmatprep.subr.bf16.mxu0 0
        %719 = vmatpush1.bf16.xpose.msra.mxu0 %v691
        %720 = vmatprep.subr.bf16.mxu0 0
        %721 = vmatpush1.bf16.xpose.msra.mxu0 %v688
        %722 = vmatprep.subr.bf16.mxu0 0
        %723 = vmatpush1.bf16.xpose.msra.mxu0 %v685
        %724 = vmatprep.subr.bf16.mxu0 0
        %725 = vmatpush2.bf16.xpose.msra.mxu0 0
        %726 = vmatprep.subr.bf16.mxu0 0
        %727 = vmatpush2.bf16.xpose.msra.mxu0 0
        %728 = vmatprep.subr.bf16.mxu0 0
        %729 = vmatpush2.bf16.xpose.msra.mxu0 0
        %730 = vmatprep.subr.bf16.mxu0 0
        %731 = vmatpush2.bf16.xpose.msra.mxu0 0
        %732 = vmatprep.subr.bf16.mxu0 0
        %733 = vmatpush2.bf16.xpose.msra.mxu0 0
        %734 = vmatprep.subr.bf16.mxu0 0
        %735 = vmatpush2.bf16.xpose.msra.mxu0 0
        %736 = vmatprep.subr.bf16.mxu0 0
        %737 = vmatpush2.bf16.xpose.msra.mxu0 0
        %738 = vmatprep.subr.bf16.mxu0 0
        %739 = vmatpush2.bf16.xpose.msra.mxu0 0
        %740 = vmatprep.mubr.bf16.mxu0 0
        %741 = vmatmul.mubr.bf16.gmra.mxu0 %v682
        %v742 = vpop.f32.mrf.mxu0
        %v743 = vadd.f32 0.0, %v742
        %v744 = vpop.f32.mrf.mxu0
        %v745 = vpop.f32.mrf.mxu0
        %v746 = vadd.f32 0.0, %v745
        %v747 = vpop.f32.mrf.mxu0
        %748 = vdwg.mxu0
        %v751 = vunpack.c.l.b16 %v279
        %v752 = vunpack.c.l.b16 %v280
        %v753 = vpack.c.b16 %v752, %v751
        %v770 = vunpack.c.l.b16 %v329
        %v771 = vunpack.c.l.b16 %v330
        %v772 = vunpack.c.l.b16 %v331
        %v773 = vunpack.c.l.b16 %v332
        %v774 = vunpack.c.l.b16 %v333
        %v775 = vunpack.c.l.b16 %v334
        %v776 = vunpack.c.l.b16 %v335
        %v777 = vunpack.c.l.b16 %v336
        %v778 = vunpack.c.l.b16 %v337
        %v779 = vunpack.c.l.b16 %v338
        %v780 = vunpack.c.l.b16 %v339
        %v781 = vunpack.c.l.b16 %v340
        %v782 = vunpack.c.l.b16 %v341
        %v783 = vunpack.c.l.b16 %v342
        %v784 = vunpack.c.l.b16 %v343
        %v785 = vunpack.c.l.b16 %v344
        %v786 = vpack.c.b16 %v771, %v770
        %v787 = vpack.c.b16 %v773, %v772
        %v788 = vpack.c.b16 %v775, %v774
        %v789 = vpack.c.b16 %v777, %v776
        %v790 = vpack.c.b16 %v779, %v778
        %v791 = vpack.c.b16 %v781, %v780
        %v792 = vpack.c.b16 %v783, %v782
        %v793 = vpack.c.b16 %v785, %v784
        %v795 = vsel %vm454, %v753, 0
        %v798 = vsel %vm454, %v786, 0
        %v801 = vsel %vm454, %v787, 0
        %v804 = vsel %vm454, %v788, 0
        %v807 = vsel %vm454, %v789, 0
        %v810 = vsel %vm454, %v790, 0
        %v813 = vsel %vm454, %v791, 0
        %v816 = vsel %vm454, %v792, 0
        %v819 = vsel %vm454, %v793, 0
        %821 = vmatprep.subr.bf16.mxu0 0
        %822 = vmatpush1.bf16.xpose.msra.mxu0 %v819
        %823 = vmatprep.subr.bf16.mxu0 0
        %824 = vmatpush1.bf16.xpose.msra.mxu0 %v816
        %825 = vmatprep.subr.bf16.mxu0 0
        %826 = vmatpush1.bf16.xpose.msra.mxu0 %v813
        %827 = vmatprep.subr.bf16.mxu0 0
        %828 = vmatpush1.bf16.xpose.msra.mxu0 %v810
        %829 = vmatprep.subr.bf16.mxu0 0
        %830 = vmatpush1.bf16.xpose.msra.mxu0 %v807
        %831 = vmatprep.subr.bf16.mxu0 0
        %832 = vmatpush1.bf16.xpose.msra.mxu0 %v804
        %833 = vmatprep.subr.bf16.mxu0 0
        %834 = vmatpush1.bf16.xpose.msra.mxu0 %v801
        %835 = vmatprep.subr.bf16.mxu0 0
        %836 = vmatpush1.bf16.xpose.msra.mxu0 %v798
        %837 = vmatprep.subr.bf16.mxu0 0
        %838 = vmatpush2.bf16.xpose.msra.mxu0 0
        %839 = vmatprep.subr.bf16.mxu0 0
        %840 = vmatpush2.bf16.xpose.msra.mxu0 0
        %841 = vmatprep.subr.bf16.mxu0 0
        %842 = vmatpush2.bf16.xpose.msra.mxu0 0
        %843 = vmatprep.subr.bf16.mxu0 0
        %844 = vmatpush2.bf16.xpose.msra.mxu0 0
        %845 = vmatprep.subr.bf16.mxu0 0
        %846 = vmatpush2.bf16.xpose.msra.mxu0 0
        %847 = vmatprep.subr.bf16.mxu0 0
        %848 = vmatpush2.bf16.xpose.msra.mxu0 0
        %849 = vmatprep.subr.bf16.mxu0 0
        %850 = vmatpush2.bf16.xpose.msra.mxu0 0
        %851 = vmatprep.subr.bf16.mxu0 0
        %852 = vmatpush2.bf16.xpose.msra.mxu0 0
        %853 = vmatprep.mubr.bf16.mxu0 0
        %854 = vmatmul.mubr.bf16.gmra.mxu0 %v795
        %v855 = vpop.f32.mrf.mxu0
        %v856 = vadd.f32 0.0, %v855
        %v857 = vpop.f32.mrf.mxu0
        %v858 = vpop.f32.mrf.mxu0
        %v859 = vadd.f32 0.0, %v858
        %v860 = vpop.f32.mrf.mxu0
        %861 = vdwg.mxu0
        %v862 = vlaneseq
        %v863 = vand.u32 %v862, 127
        %vm864 = vcmp.ge.s32.totalorder %v863, 16
        %v865 = vsel %vm864, 1, 0
        %vm866 = vcmp.eq.s32.totalorder %v865, 1
        %v867 = vsel %vm866, -4.2949673e+09, %v517
        %v868 = vsel %vm866, -4.2949673e+09, %v520
        %v869 = vsel %vm866, -4.2949673e+09, %v630
        %v870 = vsel %vm866, -4.2949673e+09, %v633
        %v871 = vsel %vm866, -4.2949673e+09, %v743
        %v872 = vsel %vm866, -4.2949673e+09, %v746
        %v873 = vsel %vm866, -4.2949673e+09, %v856
        %v874 = vsel %vm866, -4.2949673e+09, %v859
        %875 = vmax.xlane.f32.xlu0 %v867
        %v876 = vpop.xlane.xlu0 %875
        %877 = vmax.xlane.f32.xlu0 %v868
        %v878 = vpop.xlane.xlu0 %877
        %879 = vmax.xlane.f32.xlu0 %v869
        %v880 = vpop.xlane.xlu0 %879
        %881 = vmax.xlane.f32.xlu0 %v870
        %v882 = vpop.xlane.xlu0 %881
        %883 = vmax.xlane.f32.xlu0 %v871
        %v884 = vpop.xlane.xlu0 %883
        %885 = vmax.xlane.f32.xlu0 %v872
        %v886 = vpop.xlane.xlu0 %885
        %887 = vmax.xlane.f32.xlu0 %v873
        %v888 = vpop.xlane.xlu0 %887
        %889 = vmax.xlane.f32.xlu0 %v874
        %v890 = vpop.xlane.xlu0 %889
        %v891 = vsub.f32 %v867, %v876
        %v892 = vsub.f32 %v868, %v878
        %v893 = vsub.f32 %v869, %v880
        %v894 = vsub.f32 %v870, %v882
        %v895 = vsub.f32 %v871, %v884
        %v896 = vsub.f32 %v872, %v886
        %v897 = vsub.f32 %v873, %v888
        %v898 = vsub.f32 %v874, %v890
        %v899 = vmul.f32 %v891, 1.442695
        %v900 = vpow.pop %v899
        %v901 = vmul.f32 %v892, 1.442695
        %v902 = vpow.pop %v901
        %v903 = vmul.f32 %v893, 1.442695
        %v904 = vpow.pop %v903
        %v905 = vmul.f32 %v894, 1.442695
        %v906 = vpow.pop %v905
        %v907 = vmul.f32 %v895, 1.442695
        %v908 = vpow.pop %v907
        %v909 = vmul.f32 %v896, 1.442695
        %v910 = vpow.pop %v909
        %v911 = vmul.f32 %v897, 1.442695
        %v912 = vpow.pop %v911
        %v913 = vmul.f32 %v898, 1.442695
        %v914 = vpow.pop %v913
        %915 = vadd.xlane.f32.xlu0 %v900
        %v916 = vpop.xlane.xlu0 %915
        %917 = vadd.xlane.f32.xlu0 %v902
        %v918 = vpop.xlane.xlu0 %917
        %919 = vadd.xlane.f32.xlu0 %v904
        %v920 = vpop.xlane.xlu0 %919
        %921 = vadd.xlane.f32.xlu0 %v906
        %v922 = vpop.xlane.xlu0 %921
        %923 = vadd.xlane.f32.xlu0 %v908
        %v924 = vpop.xlane.xlu0 %923
        %925 = vadd.xlane.f32.xlu0 %v910
        %v926 = vpop.xlane.xlu0 %925
        %927 = vadd.xlane.f32.xlu0 %v912
        %v928 = vpop.xlane.xlu0 %927
        %929 = vadd.xlane.f32.xlu0 %v914
        %v930 = vpop.xlane.xlu0 %929
        %v931 = vrcp.pop %v916
        %v932 = vmul.f32 %v900, %v931
        %v933 = vrcp.pop %v918
        %v934 = vmul.f32 %v902, %v933
        %v935 = vrcp.pop %v920
        %v936 = vmul.f32 %v904, %v935
        %v937 = vrcp.pop %v922
        %v938 = vmul.f32 %v906, %v937
        %v939 = vrcp.pop %v924
        %v940 = vmul.f32 %v908, %v939
        %v941 = vrcp.pop %v926
        %v942 = vmul.f32 %v910, %v941
        %v943 = vrcp.pop %v928
        %v944 = vmul.f32 %v912, %v943
        %v945 = vrcp.pop %v930
        %v946 = vmul.f32 %v914, %v945
        %v947 = vpack.c.bf16 %v934, %v932
        %v948 = vpack.c.bf16 %v938, %v936
        %v949 = vpack.c.bf16 %v942, %v940
        %v950 = vpack.c.bf16 %v946, %v944
        %v955 = vunpack.c.l.b16 %v947
        %v956 = vunpack.c.h.b16 %v947
        %v957 = vunpack.c.l.b16 %v948
        %v958 = vunpack.c.h.b16 %v948
        %v959 = vunpack.c.l.b16 %v949
        %v960 = vunpack.c.h.b16 %v949
        %v961 = vunpack.c.l.b16 %v950
        %v962 = vunpack.c.h.b16 %v950
        %v963 = vpack.c.b16 %v955, %v955
        %v964 = vpack.c.b16 %v956, %v956
        %v965 = vpack.c.b16 %v957, %v957
        %v966 = vpack.c.b16 %v958, %v958
        %v967 = vpack.c.b16 %v959, %v959
        %v968 = vpack.c.b16 %v960, %v960
        %v969 = vpack.c.b16 %v961, %v961
        %v970 = vpack.c.b16 %v962, %v962
        %979 = vst [vmem:[%s240] sm:$0xf] %v963
        %980 = vst [vmem:[%s240 + $0x4] sm:$0xf] %v964
        %981 = vst [vmem:[%s240 + $0x8] sm:$0xf] %v965
        %982 = vst [vmem:[%s240 + $0xc] sm:$0xf] %v966
        %983 = vst [vmem:[%s240 + $0x10] sm:$0xf] %v967
        %984 = vst [vmem:[%s240 + $0x14] sm:$0xf] %v968
        %985 = vst [vmem:[%s240 + $0x18] sm:$0xf] %v969
        %986 = vst [vmem:[%s240 + $0x1c] sm:$0xf] %v970
        %v1003 = vunpack.c.l.b16 %v345
        %v1004 = vunpack.c.l.b16 %v346
        %v1005 = vunpack.c.l.b16 %v347
        %v1006 = vunpack.c.l.b16 %v348
        %v1007 = vunpack.c.l.b16 %v349
        %v1008 = vunpack.c.l.b16 %v350
        %v1009 = vunpack.c.l.b16 %v351
        %v1010 = vunpack.c.l.b16 %v352
        %v1011 = vunpack.c.l.b16 %v353
        %v1012 = vunpack.c.l.b16 %v354
        %v1013 = vunpack.c.l.b16 %v355
        %v1014 = vunpack.c.l.b16 %v356
        %v1015 = vunpack.c.l.b16 %v357
        %v1016 = vunpack.c.l.b16 %v358
        %v1017 = vunpack.c.l.b16 %v359
        %v1018 = vunpack.c.l.b16 %v360
        %v1019 = vpack.c.b16 %v1004, %v1003
        %v1020 = vpack.c.b16 %v1006, %v1005
        %v1021 = vpack.c.b16 %v1008, %v1007
        %v1022 = vpack.c.b16 %v1010, %v1009
        %v1023 = vpack.c.b16 %v1012, %v1011
        %v1024 = vpack.c.b16 %v1014, %v1013
        %v1025 = vpack.c.b16 %v1016, %v1015
        %v1026 = vpack.c.b16 %v1018, %v1017
        %1035 = vmatprep.subr.bf16.mxu0 0
        %1036 = vmatpush1.bf16.msra.mxu0 %v1026
        %1037 = vmatprep.subr.bf16.mxu0 0
        %1038 = vmatpush1.bf16.msra.mxu0 %v1025
        %1039 = vmatprep.subr.bf16.mxu0 0
        %1040 = vmatpush1.bf16.msra.mxu0 %v1024
        %1041 = vmatprep.subr.bf16.mxu0 0
        %1042 = vmatpush1.bf16.msra.mxu0 %v1023
        %1043 = vmatprep.subr.bf16.mxu0 0
        %1044 = vmatpush1.bf16.msra.mxu0 %v1022
        %1045 = vmatprep.subr.bf16.mxu0 0
        %1046 = vmatpush1.bf16.msra.mxu0 %v1021
        %1047 = vmatprep.subr.bf16.mxu0 0
        %1048 = vmatpush1.bf16.msra.mxu0 %v1020
        %1049 = vmatprep.subr.bf16.mxu0 0
        %1050 = vmatpush1.bf16.msra.mxu0 %v1019
        %1051 = vmatprep.subr.bf16.mxu0 0
        %1052 = vmatpush2.bf16.msra.mxu0 0
        %1053 = vmatprep.subr.bf16.mxu0 0
        %1054 = vmatpush2.bf16.msra.mxu0 0
        %1055 = vmatprep.subr.bf16.mxu0 0
        %1056 = vmatpush2.bf16.msra.mxu0 0
        %1057 = vmatprep.subr.bf16.mxu0 0
        %1058 = vmatpush2.bf16.msra.mxu0 0
        %1059 = vmatprep.subr.bf16.mxu0 0
        %1060 = vmatpush2.bf16.msra.mxu0 0
        %1061 = vmatprep.subr.bf16.mxu0 0
        %1062 = vmatpush2.bf16.msra.mxu0 0
        %1063 = vmatprep.subr.bf16.mxu0 0
        %1064 = vmatpush2.bf16.msra.mxu0 0
        %1065 = vmatprep.subr.bf16.mxu0 0
        %1066 = vmatpush2.bf16.msra.mxu0 0
        %1067 = vmatprep.mubr.bf16.mxu0 0
        %1068 = vmatmul.mubr.bf16.gmra.mxu0 %v947
        %v1069 = vpop.f32.mrf.mxu0
        %v1070 = vadd.f32 0.0, %v1069
        %v1071 = vpop.f32.mrf.mxu0
        %v1072 = vpop.f32.mrf.mxu0
        %v1073 = vadd.f32 0.0, %v1072
        %v1074 = vpop.f32.mrf.mxu0
        %1075 = vdwg.mxu0
        %v1092 = vunpack.c.l.b16 %v361
        %v1093 = vunpack.c.l.b16 %v362
        %v1094 = vunpack.c.l.b16 %v363
        %v1095 = vunpack.c.l.b16 %v364
        %v1096 = vunpack.c.l.b16 %v365
        %v1097 = vunpack.c.l.b16 %v366
        %v1098 = vunpack.c.l.b16 %v367
        %v1099 = vunpack.c.l.b16 %v368
        %v1100 = vunpack.c.l.b16 %v369
        %v1101 = vunpack.c.l.b16 %v370
        %v1102 = vunpack.c.l.b16 %v371
        %v1103 = vunpack.c.l.b16 %v372
        %v1104 = vunpack.c.l.b16 %v373
        %v1105 = vunpack.c.l.b16 %v374
        %v1106 = vunpack.c.l.b16 %v375
        %v1107 = vunpack.c.l.b16 %v376
        %v1108 = vpack.c.b16 %v1093, %v1092
        %v1109 = vpack.c.b16 %v1095, %v1094
        %v1110 = vpack.c.b16 %v1097, %v1096
        %v1111 = vpack.c.b16 %v1099, %v1098
        %v1112 = vpack.c.b16 %v1101, %v1100
        %v1113 = vpack.c.b16 %v1103, %v1102
        %v1114 = vpack.c.b16 %v1105, %v1104
        %v1115 = vpack.c.b16 %v1107, %v1106
        %1124 = vmatprep.subr.bf16.mxu0 0
        %1125 = vmatpush1.bf16.msra.mxu0 %v1115
        %1126 = vmatprep.subr.bf16.mxu0 0
        %1127 = vmatpush1.bf16.msra.mxu0 %v1114
        %1128 = vmatprep.subr.bf16.mxu0 0
        %1129 = vmatpush1.bf16.msra.mxu0 %v1113
        %1130 = vmatprep.subr.bf16.mxu0 0
        %1131 = vmatpush1.bf16.msra.mxu0 %v1112
        %1132 = vmatprep.subr.bf16.mxu0 0
        %1133 = vmatpush1.bf16.msra.mxu0 %v1111
        %1134 = vmatprep.subr.bf16.mxu0 0
        %1135 = vmatpush1.bf16.msra.mxu0 %v1110
        %1136 = vmatprep.subr.bf16.mxu0 0
        %1137 = vmatpush1.bf16.msra.mxu0 %v1109
        %1138 = vmatprep.subr.bf16.mxu0 0
        %1139 = vmatpush1.bf16.msra.mxu0 %v1108
        %1140 = vmatprep.subr.bf16.mxu0 0
        %1141 = vmatpush2.bf16.msra.mxu0 0
        %1142 = vmatprep.subr.bf16.mxu0 0
        %1143 = vmatpush2.bf16.msra.mxu0 0
        %1144 = vmatprep.subr.bf16.mxu0 0
        %1145 = vmatpush2.bf16.msra.mxu0 0
        %1146 = vmatprep.subr.bf16.mxu0 0
        %1147 = vmatpush2.bf16.msra.mxu0 0
        %1148 = vmatprep.subr.bf16.mxu0 0
        %1149 = vmatpush2.bf16.msra.mxu0 0
        %1150 = vmatprep.subr.bf16.mxu0 0
        %1151 = vmatpush2.bf16.msra.mxu0 0
        %1152 = vmatprep.subr.bf16.mxu0 0
        %1153 = vmatpush2.bf16.msra.mxu0 0
        %1154 = vmatprep.subr.bf16.mxu0 0
        %1155 = vmatpush2.bf16.msra.mxu0 0
        %1156 = vmatprep.mubr.bf16.mxu0 0
        %1157 = vmatmul.mubr.bf16.gmra.mxu0 %v948
        %v1158 = vpop.f32.mrf.mxu0
        %v1159 = vadd.f32 0.0, %v1158
        %v1160 = vpop.f32.mrf.mxu0
        %v1161 = vpop.f32.mrf.mxu0
        %v1162 = vadd.f32 0.0, %v1161
        %v1163 = vpop.f32.mrf.mxu0
        %1164 = vdwg.mxu0
        %v1181 = vunpack.c.l.b16 %v377
        %v1182 = vunpack.c.l.b16 %v378
        %v1183 = vunpack.c.l.b16 %v379
        %v1184 = vunpack.c.l.b16 %v380
        %v1185 = vunpack.c.l.b16 %v381
        %v1186 = vunpack.c.l.b16 %v382
        %v1187 = vunpack.c.l.b16 %v383
        %v1188 = vunpack.c.l.b16 %v384
        %v1189 = vunpack.c.l.b16 %v385
        %v1190 = vunpack.c.l.b16 %v386
        %v1191 = vunpack.c.l.b16 %v387
        %v1192 = vunpack.c.l.b16 %v388
        %v1193 = vunpack.c.l.b16 %v389
        %v1194 = vunpack.c.l.b16 %v390
        %v1195 = vunpack.c.l.b16 %v391
        %v1196 = vunpack.c.l.b16 %v392
        %v1197 = vpack.c.b16 %v1182, %v1181
        %v1198 = vpack.c.b16 %v1184, %v1183
        %v1199 = vpack.c.b16 %v1186, %v1185
        %v1200 = vpack.c.b16 %v1188, %v1187
        %v1201 = vpack.c.b16 %v1190, %v1189
        %v1202 = vpack.c.b16 %v1192, %v1191
        %v1203 = vpack.c.b16 %v1194, %v1193
        %v1204 = vpack.c.b16 %v1196, %v1195
        %1213 = vmatprep.subr.bf16.mxu0 0
        %1214 = vmatpush1.bf16.msra.mxu0 %v1204
        %1215 = vmatprep.subr.bf16.mxu0 0
        %1216 = vmatpush1.bf16.msra.mxu0 %v1203
        %1217 = vmatprep.subr.bf16.mxu0 0
        %1218 = vmatpush1.bf16.msra.mxu0 %v1202
        %1219 = vmatprep.subr.bf16.mxu0 0
        %1220 = vmatpush1.bf16.msra.mxu0 %v1201
        %1221 = vmatprep.subr.bf16.mxu0 0
        %1222 = vmatpush1.bf16.msra.mxu0 %v1200
        %1223 = vmatprep.subr.bf16.mxu0 0
        %1224 = vmatpush1.bf16.msra.mxu0 %v1199
        %1225 = vmatprep.subr.bf16.mxu0 0
        %1226 = vmatpush1.bf16.msra.mxu0 %v1198
        %1227 = vmatprep.subr.bf16.mxu0 0
        %1228 = vmatpush1.bf16.msra.mxu0 %v1197
        %1229 = vmatprep.subr.bf16.mxu0 0
        %1230 = vmatpush2.bf16.msra.mxu0 0
        %1231 = vmatprep.subr.bf16.mxu0 0
        %1232 = vmatpush2.bf16.msra.mxu0 0
        %1233 = vmatprep.subr.bf16.mxu0 0
        %1234 = vmatpush2.bf16.msra.mxu0 0
        %1235 = vmatprep.subr.bf16.mxu0 0
        %1236 = vmatpush2.bf16.msra.mxu0 0
        %1237 = vmatprep.subr.bf16.mxu0 0
        %1238 = vmatpush2.bf16.msra.mxu0 0
        %1239 = vmatprep.subr.bf16.mxu0 0
        %1240 = vmatpush2.bf16.msra.mxu0 0
        %1241 = vmatprep.subr.bf16.mxu0 0
        %1242 = vmatpush2.bf16.msra.mxu0 0
        %1243 = vmatprep.subr.bf16.mxu0 0
        %1244 = vmatpush2.bf16.msra.mxu0 0
        %1245 = vmatprep.mubr.bf16.mxu0 0
        %1246 = vmatmul.mubr.bf16.gmra.mxu0 %v949
        %v1247 = vpop.f32.mrf.mxu0
        %v1248 = vadd.f32 0.0, %v1247
        %v1249 = vpop.f32.mrf.mxu0
        %v1250 = vpop.f32.mrf.mxu0
        %v1251 = vadd.f32 0.0, %v1250
        %v1252 = vpop.f32.mrf.mxu0
        %1253 = vdwg.mxu0
        %v1270 = vunpack.c.l.b16 %v393
        %v1271 = vunpack.c.l.b16 %v394
        %v1272 = vunpack.c.l.b16 %v395
        %v1273 = vunpack.c.l.b16 %v396
        %v1274 = vunpack.c.l.b16 %v397
        %v1275 = vunpack.c.l.b16 %v398
        %v1276 = vunpack.c.l.b16 %v399
        %v1277 = vunpack.c.l.b16 %v400
        %v1278 = vunpack.c.l.b16 %v401
        %v1279 = vunpack.c.l.b16 %v402
        %v1280 = vunpack.c.l.b16 %v403
        %v1281 = vunpack.c.l.b16 %v404
        %v1282 = vunpack.c.l.b16 %v405
        %v1283 = vunpack.c.l.b16 %v406
        %v1284 = vunpack.c.l.b16 %v407
        %v1285 = vunpack.c.l.b16 %v408
        %v1286 = vpack.c.b16 %v1271, %v1270
        %v1287 = vpack.c.b16 %v1273, %v1272
        %v1288 = vpack.c.b16 %v1275, %v1274
        %v1289 = vpack.c.b16 %v1277, %v1276
        %v1290 = vpack.c.b16 %v1279, %v1278
        %v1291 = vpack.c.b16 %v1281, %v1280
        %v1292 = vpack.c.b16 %v1283, %v1282
        %v1293 = vpack.c.b16 %v1285, %v1284
        %1302 = vmatprep.subr.bf16.mxu0 0
        %1303 = vmatpush1.bf16.msra.mxu0 %v1293
        %1304 = vmatprep.subr.bf16.mxu0 0
        %1305 = vmatpush1.bf16.msra.mxu0 %v1292
        %1306 = vmatprep.subr.bf16.mxu0 0
        %1307 = vmatpush1.bf16.msra.mxu0 %v1291
        %1308 = vmatprep.subr.bf16.mxu0 0
        %1309 = vmatpush1.bf16.msra.mxu0 %v1290
        %1310 = vmatprep.subr.bf16.mxu0 0
        %1311 = vmatpush1.bf16.msra.mxu0 %v1289
        %1312 = vmatprep.subr.bf16.mxu0 0
        %1313 = vmatpush1.bf16.msra.mxu0 %v1288
        %1314 = vmatprep.subr.bf16.mxu0 0
        %1315 = vmatpush1.bf16.msra.mxu0 %v1287
        %1316 = vmatprep.subr.bf16.mxu0 0
        %1317 = vmatpush1.bf16.msra.mxu0 %v1286
        %1318 = vmatprep.subr.bf16.mxu0 0
        %1319 = vmatpush2.bf16.msra.mxu0 0
        %1320 = vmatprep.subr.bf16.mxu0 0
        %1321 = vmatpush2.bf16.msra.mxu0 0
        %1322 = vmatprep.subr.bf16.mxu0 0
        %1323 = vmatpush2.bf16.msra.mxu0 0
        %1324 = vmatprep.subr.bf16.mxu0 0
        %1325 = vmatpush2.bf16.msra.mxu0 0
        %1326 = vmatprep.subr.bf16.mxu0 0
        %1327 = vmatpush2.bf16.msra.mxu0 0
        %1328 = vmatprep.subr.bf16.mxu0 0
        %1329 = vmatpush2.bf16.msra.mxu0 0
        %1330 = vmatprep.subr.bf16.mxu0 0
        %1331 = vmatpush2.bf16.msra.mxu0 0
        %1332 = vmatprep.subr.bf16.mxu0 0
        %1333 = vmatpush2.bf16.msra.mxu0 0
        %1334 = vmatprep.mubr.bf16.mxu0 0
        %1335 = vmatmul.mubr.bf16.gmra.mxu0 %v950
        %v1336 = vpop.f32.mrf.mxu0
        %v1337 = vadd.f32 0.0, %v1336
        %v1338 = vpop.f32.mrf.mxu0
        %v1339 = vpop.f32.mrf.mxu0
        %v1340 = vadd.f32 0.0, %v1339
        %v1341 = vpop.f32.mrf.mxu0
        %1342 = vdwg.mxu0
        %1343 = vst.msk [vmem:[%s233] sm:$0xff] %vm454, %v1070
        %1344 = vst.msk [vmem:[%s233 + $0x8] sm:$0xff] %vm454, %v1073
        %1347 = vrot.lane.b32.xlu0 %v1159, 32
        %v1348 = vpop.permute.xlu0 %1347
        %1349 = vrot.lane.b32.xlu0 %v1162, 32
        %v1350 = vpop.permute.xlu0 %1349
        %vm1353 = vcmask 523520
        %1354 = vst.msk [vmem:[%s233] sm:$0xff] %vm1353, %v1348
        %1355 = vst.msk [vmem:[%s233 + $0x8] sm:$0xff] %vm1353, %v1350
        %1358 = vrot.lane.b32.xlu0 %v1248, 64
        %v1359 = vpop.permute.xlu0 %1358
        %1360 = vrot.lane.b32.xlu0 %v1251, 64
        %v1361 = vpop.permute.xlu0 %1360
        %vm1364 = vcmask 785920
        %1365 = vst.msk [vmem:[%s233] sm:$0xff] %vm1364, %v1359
        %1366 = vst.msk [vmem:[%s233 + $0x8] sm:$0xff] %vm1364, %v1361
        %1369 = vrot.lane.b32.xlu0 %v1337, 96
        %v1370 = vpop.permute.xlu0 %1369
        %1371 = vrot.lane.b32.xlu0 %v1340, 96
        %v1372 = vpop.permute.xlu0 %1371
        %vm1375 = vcmask 1048320
        %1376 = vst.msk [vmem:[%s233] sm:$0xff] %vm1375, %v1370
        %1377 = vst.msk [vmem:[%s233 + $0x8] sm:$0xff] %vm1375, %v1372
        %s1378 = sand.u32 %s108, 1
        %s1379 = scalar_lea.sflag [#allocation3], %s1378
        %s1380 = sand.u32 %s108, 1
        %s1381 = smul.addr %s1380, 16
        %s1382 = scalar_lea.vmem [#allocation2], %s1381
        %s1383 = sand.u32 %s134, 1
        %s1384 = scalar_lea.sflag [#allocation5], %s1383
        %s1385 = sand.u32 %s134, 1
        %s1386 = smul.addr %s1385, 32
        %s1387 = scalar_lea.vmem [#allocation4], %s1386
        // Predicated region
        $region33: #{tpu_custom_call.1} parent=31 // pred_check
          %p1388 = pneg %p118
        $region34: #{tpu_custom_call.1} parent=31 // pred_check_branch
          %1390 = sbr.rel (%p1388) target = $region36
        $region35: #{tpu_custom_call.1} parent=31 // pred_region
          %s1392 = ssub.s32 256, 256
          %1393 = vsyncadd %s1379, %s1392
          %s1394 = smul.addr %s22, 2
          %s1395 = smul.addr %s1394, 128
          %s1396 = scalar_lea.hbm %s3, %s1395
          %s1397 = sshll.u32 %s1382, 4
          %s1398 = int_to_ptr.vmem [resolvable:$true] %s1397
          %1403 = dma.vmem_to_hbm [thread:$0]  %s1398, 256, %s1396, %s1379, 128, 128, 8
        $region36: #{tpu_custom_call.1} parent=31 // pred_fallthru
          _
        // Predicated region
        $region37: #{tpu_custom_call.1} parent=31 // pred_check
          %p1404 = pneg %p144
        $region38: #{tpu_custom_call.1} parent=31 // pred_check_branch
          %1406 = sbr.rel (%p1404) target = $region40
        $region39: #{tpu_custom_call.1} parent=31 // pred_region
          %s1407 = smul.u32 4, %s22
          %s1409 = ssub.s32 512, 512
          %1410 = vsyncadd %s1384, %s1409
          %s1411 = smul.addr %s1407, 2
          %s1412 = smul.addr %s1411, 64
          %s1413 = scalar_lea.hbm %s4, %s1412
          %s1414 = sshll.u32 %s1387, 4
          %s1415 = int_to_ptr.vmem [resolvable:$true] %s1414
          %1420 = dma.vmem_to_hbm [thread:$0]  %s1415, 512, %s1413, %s1384, 64, 64, 4
        $region40: #{tpu_custom_call.1} parent=31 // pred_fallthru
          _
      $region32: #{tpu_custom_call.1} parent=5 // pred_fallthru
        _
      %p1421 = scmp.le.s32.totalorder 2, %s17
      // Predicated region
      $region41: #{tpu_custom_call.1} parent=5 // pred_check
        %p1422 = pneg %p1421
      $region42: #{tpu_custom_call.1} parent=5 // pred_check_branch
        %1424 = sbr.rel (%p1422) target = $region44
      $region43: #{tpu_custom_call.1} parent=5 // pred_region
        %s1425 = ssub.s32 %s17, 2
        // Predicated region
        $region45: #{tpu_custom_call.1} parent=43 // pred_check
          %p1426 = pneg %p124
        $region46: #{tpu_custom_call.1} parent=43 // pred_check_branch
          %1428 = sbr.rel (%p1426) target = $region48
        $region47: #{tpu_custom_call.1} parent=43 // pred_region
          %s1429 = sand.u32 %s109, 1
          %s1430 = scalar_lea.sflag [#allocation3], %s1429
          %s1431 = sand.u32 %s109, 1
          %s1432 = smul.addr %s1431, 16
          %s1433 = scalar_lea.vmem [#allocation2], %s1432
          %1434 = dma.done %s1430, 256
        $region48: #{tpu_custom_call.1} parent=43 // pred_fallthru
          _
        // Predicated region
        $region49: #{tpu_custom_call.1} parent=43 // pred_check
          %p1435 = pneg %p150
        $region50: #{tpu_custom_call.1} parent=43 // pred_check_branch
          %1437 = sbr.rel (%p1435) target = $region52
        $region51: #{tpu_custom_call.1} parent=43 // pred_region
          %s1438 = sand.u32 %s135, 1
          %s1439 = scalar_lea.sflag [#allocation5], %s1438
          %s1440 = sand.u32 %s135, 1
          %s1441 = smul.addr %s1440, 32
          %s1442 = scalar_lea.vmem [#allocation4], %s1441
          %1443 = dma.done %s1439, 512
        $region52: #{tpu_custom_call.1} parent=43 // pred_fallthru
          _
      $region44: #{tpu_custom_call.1} parent=5 // pred_fallthru
        _
    $region6: #{tpu_custom_call.1} parent=1 // loop_footer
      %s21 = sadd.s32 1, %s17
    $region7: #{tpu_custom_call.1} parent=1 // loop_footer_branch
      %16 = sbr.rel target = $region3
    $region8: #{tpu_custom_call.1} parent=1 // loop_exit
      _
    %1444 = vsyncpa [#allocation3], 1
    %s1445 = scalar_lea.sflag [#allocation3], 1
    %1446 = vsyncpa %s1445, 1
    %1447 = vsyncpa [#allocation5], 1
    %s1448 = scalar_lea.sflag [#allocation5], 1
    %1449 = vsyncpa %s1448, 1

</llo_original>
